<compile_context>
chip_gen: v6e
topology: v6e:2x2x1
jax: 0.10.0
libtpu: 0.0.40
codegen_flags: <defaults>
</compile_context>

<pallas_src>
import functools

import jax
import jax.numpy as jnp
from jax.experimental import pallas as pl
from jax.experimental.pallas import tpu as pltpu

EPS = 1e-3

# Scoped VMEM limit: 32 MiB is safe on every generation (v5e/v6e: 128 MiB
# physical, v7x: only 64 MiB physical -- do not raise blindly).
_VMEM_LIMIT = 32 * 1024 * 1024
# Budget for live block bytes per grid step (headroom under _VMEM_LIMIT).
_BLOCK_BUDGET = 20 * 1024 * 1024
# Target bytes per streamed tile in the two-pass fallback (~2 MiB is at the
# measured HBM-roofline sweet spot on all generations).
_TILE_BYTES = 2 * 1024 * 1024


def _sublane_unit(dtype):
    """dtype-aware sublane tiling unit: 8 (4-byte), 16 (2-byte), 32 (1-byte)."""
    itemsize = jnp.dtype(dtype).itemsize
    if itemsize >= 4:
        return 8
    if itemsize == 2:
        return 16
    return 32


def _pick_tile(total, target, unit):
    """Tile <= max(target, unit) that is a multiple of `unit`, or the full
    (tiny) extent when total <= unit. Grids use pl.cdiv, so the tile does not
    need to divide `total`."""
    if total <= unit:
        return total
    t = min(target, total)
    return max((t // unit) * unit, unit)


def _pick_channel_tile(c, n, l, itemsize, unit):
    """Channel-block size for the fused path, or None if it can't fit VMEM."""
    # Live bytes per channel per grid step: in + out blocks double-buffered
    # (4x itemsize) plus ~3 f32 temporaries inside the kernel.
    per_ch = n * l * (4 * itemsize + 3 * 4)
    tc_max = _BLOCK_BUDGET // per_ch
    if tc_max < 1:
        return None
    if c <= unit:
        return c if c <= tc_max else None
    tc = (min(c, tc_max) // unit) * unit
    if tc < unit:
        return None
    # v7x megacore: give the parallel channel axis >= 2 grid steps when possible.
    if c >= 2 * unit and pl.cdiv(c, tc) < 2:
        tc = max(unit, ((c // 2) // unit) * unit)
    return tc


# --------------------------- fused single-pass path ---------------------------

def _fused_bn_relu_kernel(x_ref, gamma_ref, beta_ref, o_ref):
    # x_ref: (N, tc, L) channel block, fully resident in VMEM.
    x = x_ref[...].astype(jnp.float32)
    cnt = jnp.float32(x.shape[0] * x.shape[2])
    # Per-channel mean over (batch, spatial).
    mean = jnp.sum(jnp.sum(x, axis=2, keepdims=True), axis=0, keepdims=True) / cnt
    # Centered variance (second pass over VMEM-resident data -> no cancellation,
    # no extra HBM traffic).
    d = x - mean
    var = jnp.sum(jnp.sum(d * d, axis=2, keepdims=True), axis=0, keepdims=True) / cnt
    inv_std = jax.lax.rsqrt(var + EPS)
    gamma = gamma_ref[...][None, :, :]   # (1, tc, 1)
    beta = beta_ref[...][None, :, :]
    scale = gamma * inv_std
    shift = beta - mean * scale
    o_ref[...] = jnp.maximum(x * scale + shift, 0.0).astype(o_ref.dtype)


def _bn_relu_fused(x3d, gamma2d, beta2d, tc):
    n, c, l = x3d.shape
    grid = (pl.cdiv(c, tc),)
    return pl.pallas_call(
        _fused_bn_relu_kernel,
        out_shape=jax.ShapeDtypeStruct((n, c, l), x3d.dtype),
        grid_spec=pltpu.PrefetchScalarGridSpec(
            num_scalar_prefetch=0,
            grid=grid,
            in_specs=[pl.BlockSpec((n, tc, l), lambda i: (0, i, 0)),
                      pl.BlockSpec((tc, 1), lambda i: (i, 0)),
                      pl.BlockSpec((tc, 1), lambda i: (i, 0))],
            out_specs=pl.BlockSpec((n, tc, l), lambda i: (0, i, 0)),
        ),
        compiler_params=pltpu.CompilerParams(
            dimension_semantics=("parallel",),
            vmem_limit_bytes=_VMEM_LIMIT,
        ),
        cost_estimate=pl.CostEstimate(
            flops=8 * x3d.size,
            transcendentals=c,
            bytes_accessed=2 * x3d.size * jnp.dtype(x3d.dtype).itemsize,
        ),
    )(x3d, gamma2d, beta2d)


# ------------------------------ two-pass fallback -----------------------------

def _stats_kernel(x_ref, sum_ref, sq_ref, *, tl, total_l, needs_mask):
    j = pl.program_id(1)

    @pl.when(j == 0)
    def _():
        sum_ref[...] = jnp.zeros_like(sum_ref)
        sq_ref[...] = jnp.zeros_like(sq_ref)

    x = x_ref[...].astype(jnp.float32)
    if needs_mask:
        # Boundary lane tile: zero out-of-bounds lanes so they don't pollute stats.
        lane = jax.lax.broadcasted_iota(jnp.int32, x.shape, 1)
        x = jnp.where(j * tl + lane < total_l, x, 0.0)
    sum_ref[...] += jnp.sum(x, axis=1, keepdims=True)
    sq_ref[...] += jnp.sum(x * x, axis=1, keepdims=True)


def _apply_kernel(x_ref, scale_ref, shift_ref, o_ref):
    # Fused normalize + affine + ReLU: y = max(x * scale + shift, 0).
    x = x_ref[...].astype(jnp.float32)
    o_ref[...] = jnp.maximum(x * scale_ref[...] + shift_ref[...], 0.0).astype(o_ref.dtype)


def _bn_relu_two_pass(x2d, gamma2d, beta2d, n, c):
    m, l = x2d.shape
    itemsize = jnp.dtype(x2d.dtype).itemsize
    unit = _sublane_unit(x2d.dtype)

    tr = _pick_tile(m, 512, unit)
    # v7x megacore: give the parallel row axis >= 2 grid steps when possible.
    if m >= 2 * unit and pl.cdiv(m, tr) < 2:
        tr = max(unit, ((m // 2) // unit) * unit)
    tl_target = max(128, _TILE_BYTES // max(1, tr * itemsize))
    tl = _pick_tile(l, tl_target, 128)
    grid = (pl.cdiv(m, tr), pl.cdiv(l, tl))
    needs_mask = (l % tl) != 0

    # Pass A: per-row sum / sum-of-squares (reduction axis last, "arbitrary").
    row_sum, row_sq = pl.pallas_call(
        functools.partial(_stats_kernel, tl=tl, total_l=l, needs_mask=needs_mask),
        out_shape=(jax.ShapeDtypeStruct((m, 1), jnp.float32),
                   jax.ShapeDtypeStruct((m, 1), jnp.float32)),
        grid_spec=pltpu.PrefetchScalarGridSpec(
            num_scalar_prefetch=0,
            grid=grid,
            in_specs=[pl.BlockSpec((tr, tl), lambda i, j: (i, j))],
            out_specs=(pl.BlockSpec((tr, 1), lambda i, j: (i, 0)),
                       pl.BlockSpec((tr, 1), lambda i, j: (i, 0))),
        ),
        compiler_params=pltpu.CompilerParams(
            dimension_semantics=("parallel", "arbitrary"),
            vmem_limit_bytes=_VMEM_LIMIT,
        ),
    )(x2d)

    # Tiny per-channel combine in plain JAX (N*C scalars, negligible).
    cnt = float(n * l)
    ch_sum = jnp.sum(row_sum.reshape(n, c), axis=0)
    ch_sq = jnp.sum(row_sq.reshape(n, c), axis=0)
    mean = ch_sum / cnt
    # Note: E[x^2]-E[x]^2 in f32; the fused (centered-variance) path is used
    # whenever a channel slab fits VMEM, so this only covers very large slabs.
    var = jnp.maximum(ch_sq / cnt - mean * mean, 0.0)
    inv_std = jax.lax.rsqrt(var + EPS)
    scale_c = gamma2d.reshape(-1) * inv_std
    shift_c = beta2d.reshape(-1) - mean * scale_c
    scale_r = jnp.tile(scale_c, (n,)).reshape(m, 1)
    shift_r = jnp.tile(shift_c, (n,)).reshape(m, 1)

    # Pass B: fused FMA + ReLU, both axes independent ("parallel").
    out2d = pl.pallas_call(
        _apply_kernel,
        out_shape=jax.ShapeDtypeStruct((m, l), x2d.dtype),
        grid_spec=pltpu.PrefetchScalarGridSpec(
            num_scalar_prefetch=0,
            grid=grid,
            in_specs=[pl.BlockSpec((tr, tl), lambda i, j: (i, j)),
                      pl.BlockSpec((tr, 1), lambda i, j: (i, 0)),
                      pl.BlockSpec((tr, 1), lambda i, j: (i, 0))],
            out_specs=pl.BlockSpec((tr, tl), lambda i, j: (i, j)),
        ),
        compiler_params=pltpu.CompilerParams(
            dimension_semantics=("parallel", "parallel"),
            vmem_limit_bytes=_VMEM_LIMIT,
        ),
    )(x2d, scale_r, shift_r)
    return out2d


# ----------------------------------- wrapper ----------------------------------

@functools.partial(jax.jit, static_argnames=("force_two_pass",))
def bn_relu(x_nchw, gamma, beta, *, force_two_pass=False):
    """BatchNorm2d(eps=1e-3, training-mode batch stats) + ReLU.

    x_nchw: (N, C, H, W). gamma, beta: (C,). Returns (N, C, H, W).
    """
    n, c, h, w = x_nchw.shape
    l = h * w
    itemsize = jnp.dtype(x_nchw.dtype).itemsize
    unit = _sublane_unit(x_nchw.dtype)

    gamma2d = gamma.astype(jnp.float32).reshape(c, 1)
    beta2d = beta.astype(jnp.float32).reshape(c, 1)

    tc = None if force_two_pass else _pick_channel_tile(c, n, l, itemsize, unit)
    if tc is not None:
        out3d = _bn_relu_fused(x_nchw.reshape(n, c, l), gamma2d, beta2d, tc)
        return out3d.reshape(n, c, h, w)
    out2d = _bn_relu_two_pass(x_nchw.reshape(n * c, l), gamma2d, beta2d, n, c)
    return out2d.reshape(n, c, h, w)


def _reference(x, gamma, beta):
    c = x.shape[1]
    mean = jnp.mean(x, axis=(0, 2, 3), keepdims=True)
    var = jnp.mean((x - mean) ** 2, axis=(0, 2, 3), keepdims=True)
    ref = (x - mean) / jnp.sqrt(var + EPS)
    ref = ref * gamma.reshape(1, c, 1, 1) + beta.reshape(1, c, 1, 1)
    return jnp.maximum(ref, 0.0)


if __name__ == "__main__":
    key = jax.random.PRNGKey(0)

    # nn.BatchNorm2d default parameter init: weight=1, bias=0 (deterministic).
    # TODO(synk): running_mean/running_var buffer updates (training side effect)
    # are not modeled; they do not affect the forward output in training mode.

    # --- main case: fused single-pass path ---
    N, C, H, W = 2, 4, 16, 16
    x = jax.random.normal(key, (N, C, H, W), dtype=jnp.float32)
    gamma = jnp.ones((C,), dtype=jnp.float32)
    beta = jnp.zeros((C,), dtype=jnp.float32)
    out = jax.block_until_ready(bn_relu(x, gamma, beta))
    ref = _reference(x, gamma, beta)
    assert jnp.allclose(out, ref, atol=1e-4, rtol=1e-4), "fused path mismatch"

    # --- also exercise the two-pass fallback (non-divisible shape -> masking) ---
    N2, C2, H2, W2 = 2, 3, 17, 19
    x2 = jax.random.normal(jax.random.PRNGKey(1), (N2, C2, H2, W2), dtype=jnp.float32)
    g2 = jnp.ones((C2,), dtype=jnp.float32)
    b2 = jnp.zeros((C2,), dtype=jnp.float32)
    out2 = jax.block_until_ready(bn_relu(x2, g2, b2, force_two_pass=True))
    ref2 = _reference(x2, g2, b2)
    assert jnp.allclose(out2, ref2, atol=1e-4, rtol=1e-4), "two-pass path mismatch"

    print("KERNEL_OK")
</pallas_src>

<mosaic_0001>
module attributes {stable_mosaic.version = 11 : i64} {
  func.func @_fused_bn_relu_kernel(%arg0: i32, %arg1: memref<2x4x256xf32, #tpu.memory_space<vmem>>, %arg2: memref<4x1xf32, #tpu.memory_space<vmem>>, %arg3: memref<4x1xf32, #tpu.memory_space<vmem>>, %arg4: memref<2x4x256xf32, #tpu.memory_space<vmem>>) attributes {dimension_semantics = [#tpu.dimension_semantics<parallel>], iteration_bounds = array<i64: 1>, scalar_prefetch = 0 : i64, scratch_operands = 0 : i64, tpu.core_type = #tpu.core_type<tc>, window_params = [{transform_indices = @transform_0, window_bounds = array<i64: 2, 4, 256>}, {transform_indices = @transform_1, window_bounds = array<i64: 4, 1>}, {transform_indices = @transform_2, window_bounds = array<i64: 4, 1>}, {transform_indices = @transform_3, window_bounds = array<i64: 2, 4, 256>}]} {
    %c0 = arith.constant 0 : index
    %c0_0 = arith.constant 0 : index
    %c0_1 = arith.constant 0 : index
    %0 = vector.load %arg1[%c0, %c0_0, %c0_1] : memref<2x4x256xf32, #tpu.memory_space<vmem>>, vector<2x4x256xf32>
    %cst = arith.constant dense<0.000000e+00> : vector<2x4xf32>
    %1 = vector.multi_reduction <add>, %0, %cst [2] : vector<2x4x256xf32> to vector<2x4xf32>
    %2 = vector.shape_cast %1 : vector<2x4xf32> to vector<2x4x1xf32>
    %cst_2 = arith.constant dense<0.000000e+00> : vector<4x1xf32>
    %3 = vector.multi_reduction <add>, %2, %cst_2 [0] : vector<2x4x1xf32> to vector<4x1xf32>
    %4 = vector.shape_cast %3 : vector<4x1xf32> to vector<1x4x1xf32>
    %cst_3 = arith.constant 5.120000e+02 : f32
    %5 = vector.broadcast %cst_3 : f32 to vector<1x4x1xf32>
    %6 = arith.divf %4, %5 : vector<1x4x1xf32>
    %7 = vector.broadcast %6 : vector<1x4x1xf32> to vector<2x4x256xf32>
    %8 = arith.subf %0, %7 : vector<2x4x256xf32>
    %9 = arith.mulf %8, %8 : vector<2x4x256xf32>
    %cst_4 = arith.constant dense<0.000000e+00> : vector<2x4xf32>
    %10 = vector.multi_reduction <add>, %9, %cst_4 [2] : vector<2x4x256xf32> to vector<2x4xf32>
    %11 = vector.shape_cast %10 : vector<2x4xf32> to vector<2x4x1xf32>
    %cst_5 = arith.constant dense<0.000000e+00> : vector<4x1xf32>
    %12 = vector.multi_reduction <add>, %11, %cst_5 [0] : vector<2x4x1xf32> to vector<4x1xf32>
    %13 = vector.shape_cast %12 : vector<4x1xf32> to vector<1x4x1xf32>
    %cst_6 = arith.constant 5.120000e+02 : f32
    %14 = vector.broadcast %cst_6 : f32 to vector<1x4x1xf32>
    %15 = arith.divf %13, %14 : vector<1x4x1xf32>
    %cst_7 = arith.constant 1.000000e-03 : f32
    %16 = vector.broadcast %cst_7 : f32 to vector<1x4x1xf32>
    %17 = arith.addf %15, %16 : vector<1x4x1xf32>
    %18 = math.rsqrt %17 : vector<1x4x1xf32>
    %c0_8 = arith.constant 0 : index
    %c0_9 = arith.constant 0 : index
    %19 = vector.load %arg2[%c0_8, %c0_9] : memref<4x1xf32, #tpu.memory_space<vmem>>, vector<4x1xf32>
    %20 = vector.shape_cast %19 : vector<4x1xf32> to vector<1x4x1xf32>
    %c0_10 = arith.constant 0 : index
    %c0_11 = arith.constant 0 : index
    %21 = vector.load %arg3[%c0_10, %c0_11] : memref<4x1xf32, #tpu.memory_space<vmem>>, vector<4x1xf32>
    %22 = vector.shape_cast %21 : vector<4x1xf32> to vector<1x4x1xf32>
    %23 = arith.mulf %20, %18 : vector<1x4x1xf32>
    %24 = arith.mulf %6, %23 : vector<1x4x1xf32>
    %25 = arith.subf %22, %24 : vector<1x4x1xf32>
    %26 = vector.broadcast %23 : vector<1x4x1xf32> to vector<2x4x256xf32>
    %27 = arith.mulf %0, %26 : vector<2x4x256xf32>
    %28 = vector.broadcast %25 : vector<1x4x1xf32> to vector<2x4x256xf32>
    %29 = arith.addf %27, %28 : vector<2x4x256xf32>
    %cst_12 = arith.constant 0.000000e+00 : f32
    %30 = vector.broadcast %cst_12 : f32 to vector<2x4x256xf32>
    %31 = arith.maximumf %29, %30 : vector<2x4x256xf32>
    %c0_13 = arith.constant 0 : index
    %c0_14 = arith.constant 0 : index
    %c0_15 = arith.constant 0 : index
    %32 = vector.load %arg4[%c0_13, %c0_14, %c0_15] : memref<2x4x256xf32, #tpu.memory_space<vmem>>, vector<2x4x256xf32>
    tpu.vector_store %arg4[%c0_13, %c0_14, %c0_15], %31 {strides = array<i32>} : memref<2x4x256xf32, #tpu.memory_space<vmem>>, vector<2x4x256xf32>,
    return
  }
  func.func @transform_0(%arg0: i32) -> (i32, i32, i32) {
    %c0_i32 = arith.constant 0 : i32
    %c0_i32_0 = arith.constant 0 : i32
    %c0_i32_1 = arith.constant 0 : i32
    return %c0_i32, %arg0, %c0_i32_0 : i32, i32, i32
  }
  func.func @transform_1(%arg0: i32) -> (i32, i32) {
    %c0_i32 = arith.constant 0 : i32
    %c0_i32_0 = arith.constant 0 : i32
    return %arg0, %c0_i32 : i32, i32
  }
  func.func @transform_2(%arg0: i32) -> (i32, i32) {
    %c0_i32 = arith.constant 0 : i32
    %c0_i32_0 = arith.constant 0 : i32
    return %arg0, %c0_i32 : i32, i32
  }
  func.func @transform_3(%arg0: i32) -> (i32, i32, i32) {
    %c0_i32 = arith.constant 0 : i32
    %c0_i32_0 = arith.constant 0 : i32
    %c0_i32_1 = arith.constant 0 : i32
    return %c0_i32, %arg0, %c0_i32_0 : i32, i32, i32
  }
}

</mosaic_0001>

<llo_original>
// kernel: bn_relu.1
$region0: #{bn_relu.1}
  #allocation0 [shape = 'u32[]', space=smem, size = 0x4, offset = 0x4, fixed_abs, tag = 'smem constant byte address 0x4 - core index']
  #allocation1 [shape = 'u32[144,128]{1,0:T(1,128)}', space=vmem, size = 0x12000, scoped, tag = 'internal scratch']
  %s0 = inlined_call_operand.vmem [shape: f32[2,4,256], index: 0, kind: input, shape index: {}]
  %s1 = inlined_call_operand.vmem [shape: f32[4,1], index: 1, kind: input, shape index: {}]
  %s2 = inlined_call_operand.vmem [shape: f32[4,1], index: 2, kind: input, shape index: {}]
  %s3 = inlined_call_operand.vmem [shape: f32[2,4,256], index: 3, kind: output, shape index: {}]
  %s4 = sld [smem:[#allocation0]]
  $region22: #{bn_relu.1} parent=0
    _
  %s6 = ssub.s32 1, %s4
  %s7 = scalar_select 0, %s6, %s4
  // Predicated region
  $region2: #{bn_relu.1} parent=0 // pred_check
    _
  $region3: #{bn_relu.1} parent=0 // pred_check_branch
    %9 = sbr.rel (0) target = $region5
  $region4: #{bn_relu.1} parent=0 // pred_region
    _
  $region5: #{bn_relu.1} parent=0 // pred_fallthru
    _
  // Predicated region
  $region6: #{bn_relu.1} parent=0 // pred_check
    _
  $region7: #{bn_relu.1} parent=0 // pred_check_branch
    %11 = sbr.rel (0) target = $region9
  $region8: #{bn_relu.1} parent=0 // pred_region
    _
  $region9: #{bn_relu.1} parent=0 // pred_fallthru
    _
  // Predicated region
  $region10: #{bn_relu.1} parent=0 // pred_check
    _
  $region11: #{bn_relu.1} parent=0 // pred_check_branch
    %13 = sbr.rel (0) target = $region13
  $region12: #{bn_relu.1} parent=0 // pred_region
    _
  $region13: #{bn_relu.1} parent=0 // pred_fallthru
    _
  %v14 = vld [vmem:[%s0] sm:$0xff]
  %v15 = vld [vmem:[%s0 + $0x8] sm:$0xff]
  %v18 = vcombine.high %v14, %v14
  %v19 = vcombine.high %v15, %v15
  %vm22 = vcmask 1043456
  %v23 = vsel %vm22, %v14, 0.0
  %v24 = vsel %vm22, %v18, 0.0
  %v25 = vadd.f32 %v23, %v24
  %26 = vadd.xlane.f32.xlu0 %v25
  %v27 = vpop.xlane.xlu0 %26
  %v28 = vsel %vm22, %v15, 0.0
  %v29 = vsel %vm22, %v19, 0.0
  %v30 = vadd.f32 %v28, %v29
  %31 = vadd.xlane.f32.xlu0 %v30
  %v32 = vpop.xlane.xlu0 %31
  %v33 = vsel %vm22, %v27, 0.0
  %v34 = vsel %vm22, %v32, 0.0
  %v35 = vadd.f32 %v33, %v34
  %v36 = vrcp.pop 512.0
  %v37 = vmul.f32 %v35, %v36
  %v40 = vunpack.c.l.s4 839922192
  %v41 = vunpack.c.0.s8 %v40
  %v42 = vlaneseq
  %v43 = vshrl.u32 %v42, 7
  %v44 = vsub.s32 %v41, %v43
  %v45 = vrot.slane %v37, %v44
  %v47 = vsub.f32 %v14, %v45
  %v48 = vsub.f32 %v15, %v45
  %v49 = vmul.f32 %v47, %v47
  %v50 = vmul.f32 %v48, %v48
  %v53 = vcombine.high %v49, %v49
  %v54 = vcombine.high %v50, %v50
  %v57 = vsel %vm22, %v49, 0.0
  %v58 = vsel %vm22, %v53, 0.0
  %v59 = vadd.f32 %v57, %v58
  %60 = vadd.xlane.f32.xlu0 %v59
  %v61 = vpop.xlane.xlu0 %60
  %v62 = vsel %vm22, %v50, 0.0
  %v63 = vsel %vm22, %v54, 0.0
  %v64 = vadd.f32 %v62, %v63
  %65 = vadd.xlane.f32.xlu0 %v64
  %v66 = vpop.xlane.xlu0 %65
  %v67 = vsel %vm22, %v61, 0.0
  %v68 = vsel %vm22, %v66, 0.0
  %v69 = vadd.f32 %v67, %v68
  %v70 = vmul.f32 %v69, %v36
  %v71 = vadd.f32 %v70, 0.001
  %v72 = vrsqrt.pop %v71
  %v73 = vld [vmem:[%s1] sm:$0xf]
  %v74 = vld [vmem:[%s2] sm:$0xf]
  %v75 = vmul.f32 %v73, %v72
  %v76 = vmul.f32 %v37, %v75
  %v77 = vsub.f32 %v74, %v76
  %79 = vset.pattern.permute.xlu0 0
  %80 = vperm.xlu0 %79, %v75
  %v81 = vpop.permute.xlu0 %80
  %v83 = vunpack.c.l.s4 839922192
  %v84 = vunpack.c.0.s8 %v83
  %v85 = vlaneseq
  %v86 = vshrl.u32 %v85, 7
  %v87 = vsub.s32 %v84, %v86
  %v88 = vrot.slane %v81, %v87
  %v90 = vmul.f32 %v14, %v88
  %v91 = vmul.f32 %v15, %v88
  %93 = vset.pattern.permute.xlu0 0
  %94 = vperm.xlu0 %93, %v77
  %v95 = vpop.permute.xlu0 %94
  %v97 = vunpack.c.l.s4 839922192
  %v98 = vunpack.c.0.s8 %v97
  %v99 = vlaneseq
  %v100 = vshrl.u32 %v99, 7
  %v101 = vsub.s32 %v98, %v100
  %v102 = vrot.slane %v95, %v101
  %v104 = vadd.f32 %v90, %v102
  %v105 = vadd.f32 %v91, %v102
  %v106 = vmax.f32 %v104, 0.0
  %v107 = vmax.f32 %v105, 0.0
  %108 = vst [vmem:[%s3] sm:$0xff] %v106
  %109 = vst [vmem:[%s3 + $0x8] sm:$0xff] %v107
  // Predicated region
  $region14: #{bn_relu.1} parent=0 // pred_check
    _
  $region15: #{bn_relu.1} parent=0 // pred_check_branch
    %111 = sbr.rel (0) target = $region17
  $region16: #{bn_relu.1} parent=0 // pred_region
    _
  $region17: #{bn_relu.1} parent=0 // pred_fallthru
    _
  // Predicated region
  $region18: #{bn_relu.1} parent=0 // pred_check
    _
  $region19: #{bn_relu.1} parent=0 // pred_check_branch
    %113 = sbr.rel (0) target = $region21
  $region20: #{bn_relu.1} parent=0 // pred_region
    _
  $region21: #{bn_relu.1} parent=0 // pred_fallthru
    _

</llo_original>
